<compile_context>
chip_gen: v7x
topology: tpu7x:2x2x1
jax: 0.10.0
libtpu: 0.0.40
codegen_flags: <defaults>
</compile_context>

<pallas_src>
import functools
import math
from collections import defaultdict

import jax
import jax.numpy as jnp
from jax.experimental import pallas as pl
from jax.experimental.pallas import tpu as pltpu

# ----------------------------- configuration --------------------------------
HIDDEN = 32            # model.config.hidden_size (synthetic)
NUM_HEADS = 4
HEAD_DIM = HIDDEN // NUM_HEADS
INTERMEDIATE = 64
LN_EPS = 1e-5          # nn.LayerNorm default eps
LANES = 128            # packed parameter refs are padded to one lane tile

VOCAB_SIZE = 16
MAX_POSITIONS = 64     # model.config.max_position_embeddings (synthetic)
NUM_TOKEN_TYPES = 4

# stand-in tokenizer vocab ids: [bos, sep, VIDEO, AUDIO, QUERY, EOS, mask]
SPECIAL_TOKENS = jnp.array([0, 1, 2, 3, 4, 5, 6], dtype=jnp.int32)


# ------------------------------ kernel helpers -------------------------------
def _layer_norm(z, g, b):
    """LayerNorm over the last dim (f32 math)."""
    mu = jnp.mean(z, axis=-1, keepdims=True)
    var = jnp.mean(jnp.square(z - mu), axis=-1, keepdims=True)
    return (z - mu) * jax.lax.rsqrt(var + LN_EPS) * g + b


# ---------------- kernel 1: batched modality projection (Linear+LN) ----------
def _proj_ln_kernel(x_ref, w_ref, p_ref, o_ref):
    """For each modality slot m: out[m] = LayerNorm(x[m] @ w[m] + b[m]).

    x_ref: (M, Smax, Fmax) bf16  zero-padded activations (built per forward)
    w_ref: (M, Fmax, H)    bf16  zero-padded weights     (hoisted to init)
    p_ref: (M, 3, H)       f32   rows = bias / gamma / beta
    """
    for m in range(x_ref.shape[0]):          # static unroll; back-to-back MXU issues
        y = jnp.dot(x_ref[m], w_ref[m], preferred_element_type=jnp.float32)
        y = y + p_ref[m, 0:1, :]
        o_ref[m] = _layer_norm(y, p_ref[m, 1:2, :], p_ref[m, 2:3, :]).astype(o_ref.dtype)


def batched_project(x_slots, w_stack, p_stack):
    """x_slots: list of (S_i, F_i) f32 arrays (one per modality slot).
    Returns (n_slots, s_max, HIDDEN) f32; callers slice out valid rows."""
    n = len(x_slots)
    f_max = w_stack.shape[1]
    s_max = max(x.shape[0] for x in x_slots)
    s_max = -(-s_max // 8) * 8                       # sublane multiple
    x_stack = jnp.stack([
        jnp.pad(x, ((0, s_max - x.shape[0]), (0, f_max - x.shape[1])))
        for x in x_slots]).astype(jnp.bfloat16)
    return pl.pallas_call(
        _proj_ln_kernel,
        out_shape=jax.ShapeDtypeStruct((n, s_max, HIDDEN), jnp.float32),
    )(x_stack, w_stack, p_stack)


# ---------------- kernel 2: fully fused encoder layer ------------------------
def _fused_encoder_kernel(l_real, x_ref, wa_ref, wf_ref, pv_ref, o_ref, ctx_ref):
    """One BERT-style post-LN layer, fully VMEM-resident.

    x_ref : (Lpad, H) f32  masked_embed + token_type + position, zero-padded rows
    wa_ref: (2, H, 128) bf16   [0,:,:3H] = Wq|Wk|Wv,  [1,:,:H] = Wo
    wf_ref: (2, I, 128) bf16   [0,:H,:I] = W1,        [1,:,:H] = W2
    pv_ref: (8, 128) f32  rows: bqkv, bo, ln1_g, ln1_b, b1, b2, ln2_g, ln2_b
    ctx_ref: (Lpad, H) f32 VMEM scratch for the per-head attention context.
    """
    f32, bf16 = jnp.float32, jnp.bfloat16
    L, H = x_ref.shape
    x = x_ref[...]                                   # residual path stays f32

    # ---- fused QKV: ONE (L,H)@(H,3H) bf16 matmul -----------------------------
    wqkv = wa_ref[0, :, :3 * H]                      # (H, 3H) bf16
    qkv = jnp.dot(x.astype(bf16), wqkv, preferred_element_type=f32)
    qkv = qkv + pv_ref[0:1, :3 * H]                  # bq|bk|bv in one row
    scale = 1.0 / math.sqrt(HEAD_DIM)
    q = qkv[:, 0:H] * scale
    k = qkv[:, H:2 * H]
    v = qkv[:, 2 * H:3 * H]

    # additive key mask for the padded rows (hoisted out of the head loop)
    key_ids = jax.lax.broadcasted_iota(jnp.int32, (L, L), 1)
    key_mask = jnp.where(key_ids < l_real, 0.0, -1e30).astype(f32)

    # ---- per-head attention; ctx written lane-dense into VMEM scratch so a
    # single (L,H)@(H,H) output projection replaces 4 accumulated dots.
    # Static unroll: nothing is carried between heads (ctx lands in ctx_ref),
    # so per-head temporaries die at each iteration boundary.
    for h in range(NUM_HEADS):
        lo, hi = h * HEAD_DIM, (h + 1) * HEAD_DIM
        qh = q[:, lo:hi].astype(bf16)
        kh = k[:, lo:hi].astype(bf16)
        vh = v[:, lo:hi].astype(bf16)
        # contraction on the shared last dim of q and k — no explicit k.T
        s = jax.lax.dot_general(qh, kh, (((1,), (1,)), ((), ())),
                                preferred_element_type=f32)       # (L, L)
        s = s + key_mask
        s = s - jnp.max(s, axis=-1, keepdims=True)
        p = jnp.exp(s)
        p = p * pl.reciprocal(jnp.sum(p, axis=-1, keepdims=True), approx=True)
        ctx_ref[:, lo:hi] = jnp.dot(p.astype(bf16), vh,
                                    preferred_element_type=f32)   # (L, Dh)

    wo = wa_ref[1, :, :H]                            # (H, H) bf16
    attn = jnp.dot(ctx_ref[...].astype(bf16), wo,
                   preferred_element_type=f32) + pv_ref[1:2, :H]

    x1 = _layer_norm(x + attn, pv_ref[2:3, :H], pv_ref[3:4, :H])

    # ---- FFN: the (L, INTERMEDIATE) intermediate never leaves VMEM/vregs ----
    w1 = wf_ref[0, :H, :INTERMEDIATE]                # (H, I) bf16
    ff = jnp.dot(x1.astype(bf16), w1, preferred_element_type=f32)
    ff = ff + pv_ref[4:5, :INTERMEDIATE]
    # TODO(synk): torch nn.GELU default is exact erf; tanh approximation used.
    ff = jax.nn.gelu(ff, approximate=True)
    w2 = wf_ref[1, :, :H]                            # (I, H) bf16
    y = jnp.dot(ff.astype(bf16), w2, preferred_element_type=f32) + pv_ref[5:6, :H]

    o_ref[...] = _layer_norm(x1 + y, pv_ref[6:7, :H],
                             pv_ref[7:8, :H]).astype(o_ref.dtype)


def fused_encoder_layer(enc_packed, model_input):
    """Stand-in for self.model(inputs_embeds=...): one BERT-style post-LN layer.
    Single grid-less pallas_call; sequence padded to a sublane multiple and the
    padded key columns masked inside the kernel."""
    B, L, H = model_input.shape
    l_pad = -(-L // 8) * 8
    x_pad = jnp.pad(model_input[0], ((0, l_pad - L), (0, 0)))
    out = pl.pallas_call(
        functools.partial(_fused_encoder_kernel, L),
        out_shape=jax.ShapeDtypeStruct((l_pad, H), jnp.float32),
        scratch_shapes=[pltpu.VMEM((l_pad, H), jnp.float32)],
    )(x_pad, enc_packed["w_attn"], enc_packed["w_ffn"], enc_packed["pvec"])
    return out[:L][None]


# ------------------------------ parameters -----------------------------------
def _pack_projections(plist):
    """Stack projection Linear+LN params once at init (slot order: plist order)."""
    f_max = max(p["w"].shape[0] for p in plist)
    w = jnp.stack([jnp.pad(p["w"], ((0, f_max - p["w"].shape[0]), (0, 0)))
                   for p in plist]).astype(jnp.bfloat16)            # (M, Fmax, H)
    pv = jnp.stack([jnp.stack([p["b"], p["g"], p["beta"]]) for p in plist])  # (M,3,H)
    return {"w": w, "p": pv}


def _pack_encoder(enc):
    """Pack encoder weights (bf16, lane-padded) and all vectors into one tile."""
    wa = jnp.zeros((2, HIDDEN, LANES), jnp.float32)
    wa = wa.at[0, :, :3 * HIDDEN].set(
        jnp.concatenate([enc["wq"], enc["wk"], enc["wv"]], axis=1))
    wa = wa.at[1, :, :HIDDEN].set(enc["wo"])

    wf = jnp.zeros((2, INTERMEDIATE, LANES), jnp.float32)
    wf = wf.at[0, :HIDDEN, :INTERMEDIATE].set(enc["w1"])
    wf = wf.at[1, :, :HIDDEN].set(enc["w2"])

    pv = jnp.zeros((8, LANES), jnp.float32)
    pv = pv.at[0, :3 * HIDDEN].set(jnp.concatenate([enc["bq"], enc["bk"], enc["bv"]]))
    pv = pv.at[1, :HIDDEN].set(enc["bo"])
    pv = pv.at[2, :HIDDEN].set(enc["ln1_g"])
    pv = pv.at[3, :HIDDEN].set(enc["ln1_b"])
    pv = pv.at[4, :INTERMEDIATE].set(enc["b1"])
    pv = pv.at[5, :HIDDEN].set(enc["b2"])
    pv = pv.at[6, :HIDDEN].set(enc["ln2_g"])
    pv = pv.at[7, :HIDDEN].set(enc["ln2_b"])
    return {"w_attn": wa.astype(jnp.bfloat16),
            "w_ffn": wf.astype(jnp.bfloat16),
            "pvec": pv}


def init_params(key, fv, fa, ft):
    ks = iter(jax.random.split(key, 16))

    def w(din, dout):
        return 0.02 * jax.random.normal(next(ks), (din, dout), jnp.float32)

    def proj(fin):
        return {"w": w(fin, HIDDEN), "b": jnp.zeros((HIDDEN,), jnp.float32),
                "g": jnp.ones((HIDDEN,), jnp.float32),
                "beta": jnp.zeros((HIDDEN,), jnp.float32)}

    proj_video, proj_audio, proj_text = proj(fv), proj(fa), proj(ft)
    encoder = {
        "wq": w(HIDDEN, HIDDEN), "bq": jnp.zeros((HIDDEN,), jnp.float32),
        "wk": w(HIDDEN, HIDDEN), "bk": jnp.zeros((HIDDEN,), jnp.float32),
        "wv": w(HIDDEN, HIDDEN), "bv": jnp.zeros((HIDDEN,), jnp.float32),
        "wo": w(HIDDEN, HIDDEN), "bo": jnp.zeros((HIDDEN,), jnp.float32),
        "ln1_g": jnp.ones((HIDDEN,), jnp.float32),
        "ln1_b": jnp.zeros((HIDDEN,), jnp.float32),
        "w1": w(HIDDEN, INTERMEDIATE), "b1": jnp.zeros((INTERMEDIATE,), jnp.float32),
        "w2": w(INTERMEDIATE, HIDDEN), "b2": jnp.zeros((HIDDEN,), jnp.float32),
        "ln2_g": jnp.ones((HIDDEN,), jnp.float32),
        "ln2_b": jnp.zeros((HIDDEN,), jnp.float32),
    }

    return {
        "word_emb": w(VOCAB_SIZE, HIDDEN),
        "type_emb": w(NUM_TOKEN_TYPES, HIDDEN),
        "pos_emb": w(MAX_POSITIONS, HIDDEN),
        # packed, kernel-ready parameters (built once at init)
        "proj_stack": _pack_projections([proj_video, proj_audio, proj_text]),
        "encoder_packed": _pack_encoder(encoder),
    }


class Args:
    mask_video = True
    mask_audio = True
    mask_text = True
    video_feature_size = 24
    audio_feature_size = 20
    query_feature_size = 16


# ------------------------------- forward -------------------------------------
def meme_ss_base_forward(params, video, texts, text_length, audio,
                         query_frame_numbers, args, modalities, mask_key):
    bs, lv, _ = video.shape
    assert bs == 1, "torch.cat of (1,1,H) special tokens with features forces batch=1"

    audio_present = "Audio" in modalities
    la = audio.shape[1]

    # -------- all modality projections in ONE batched Pallas call -----------
    # Texts share project_text and the math is row-wise, so they are projected
    # as one slot (concatenated along the sequence axis) and split afterwards.
    text_cat = jnp.concatenate([t[0] for t in texts], axis=0)        # (sum St, Ft)
    slot_inputs, slot_ids = [video[0]], [0]
    if audio_present:
        slot_inputs.append(audio[0]); slot_ids.append(1)
    slot_inputs.append(text_cat); slot_ids.append(2)

    pstack = params["proj_stack"]
    if slot_ids == [0, 1, 2]:                        # common path: no per-forward gather
        w_stack, p_stack = pstack["w"], pstack["p"]
    else:                                            # rare: drop unused modality rows
        sel = jnp.array(slot_ids)
        w_stack, p_stack = jnp.take(pstack["w"], sel, 0), jnp.take(pstack["p"], sel, 0)

    proj_out = batched_project(slot_inputs, w_stack, p_stack)

    video = proj_out[0, :lv, :][None]
    if audio_present:
        audio = proj_out[1, :la, :][None]
    text_slot = len(slot_inputs) - 1
    text_projs, off = [], 0
    for t in texts:
        st = t.shape[1]
        text_projs.append(proj_out[text_slot, off:off + st, :][None])
        off += st

    # ------------------------- get_token_types ------------------------------
    t = text_length + len(texts)
    types = jnp.concatenate([
        jnp.zeros((lv + 1,), jnp.int32),
        jnp.ones((la + 1,), jnp.int32),
        jnp.full((t + 1,), 2, jnp.int32),
        jnp.full((1,), 2, jnp.int32),
    ])
    position = jnp.arange(types.shape[0], dtype=jnp.int32)

    # embedding lookups (glue)
    special = jnp.take(params["word_emb"], SPECIAL_TOKENS, axis=0)[None]   # (1,7,H)
    token_type_embeds = jnp.take(params["type_emb"], types, axis=0)[None]  # (1,L,H)
    position_embeds = jnp.take(params["pos_emb"], position, axis=0)[None]  # (1,L,H)

    bos, vid, aud, query, eos = (special[:, i:i + 1, :] for i in (0, 2, 3, 4, 5))
    mask_vec = special[0, 6, :]

    parts = [bos, vid, video, aud, audio]
    tags = ["bos", "vid", "video", "aud", "audio"]

    startIndexs = defaultdict(list)
    startIndexs["Video"].append(bos.shape[1] + vid.shape[1])
    startIndexs["Audio"].append(startIndexs["Video"][0] + video.shape[1] + aud.shape[1])

    # TODO(synk): torch.randperm is nondeterministic; deterministic jax.random used.
    keys = jax.random.split(mask_key, len(texts) + 1)
    audio_mask_length = int(audio.shape[1] * 0.15)
    _audio_mask_index = jax.random.permutation(keys[0], audio.shape[1])[:audio_mask_length]
    _audio_mask_index = _audio_mask_index + startIndexs["Audio"][0]

    _text_mask_index = []
    clsTokens = defaultdict(list)
    temp_count = startIndexs["Audio"][0] + audio.shape[1]
    for ti, _ in enumerate(texts):
        parts.append(query); tags.append("query")
        text_proj = text_projs[ti]
        parts.append(text_proj); tags.append("text")
        temp_count += 1
        startIndexs["Query"].append(temp_count)
        text_length_mask = int(text_proj.shape[1] * 0.2)
        perm = jax.random.permutation(keys[ti + 1], text_proj.shape[1])[:text_length_mask]
        _text_mask_index.append(perm + temp_count)
        temp_count += text_proj.shape[1]
    parts.append(eos); tags.append("eos")

    cnt = -1
    for tag, ten in zip(tags, parts):
        cnt += ten.shape[1]
        if tag == "vid":
            clsTokens["Video"].append(cnt)
        elif tag == "aud":
            clsTokens["Audio"].append(cnt)
        elif tag == "query":
            clsTokens["Query"].append(cnt)

    input_embed = jnp.concatenate(parts, axis=1)                       # (1, L, H)
    _text_mask_index = (jnp.concatenate(_text_mask_index)
                        if _text_mask_index else jnp.zeros((0,), jnp.int32))

    masks = {}
    masks["Audio"] = _audio_mask_index
    masks["Query"] = _text_mask_index
    masks["AudioEmbedd"] = input_embed[0][_audio_mask_index]
    masks["QueryEmbedd"] = input_embed[0][_text_mask_index]
    masks["Video"] = query_frame_numbers + clsTokens["Video"][0] + 1
    masks["VideoEmbedd"] = input_embed[0][masks["Video"]]

    if args.mask_video:
        input_embed = input_embed.at[0, masks["Video"]].set(mask_vec)
    if args.mask_audio:
        input_embed = input_embed.at[0, masks["Audio"]].set(mask_vec)
    if args.mask_text:
        input_embed = input_embed.at[0, masks["Query"]].set(mask_vec)

    # model_input = input_embed + token_type + position (as in create_model_input)
    model_input = input_embed + token_type_embeds + position_embeds

    # TODO(synk): init_custom_model() (pretrained LM + tokenizer) is not defined
    # in the snippet; a synthetic 1-layer BERT-style encoder stands in for
    # self.model(inputs_embeds=...), run as ONE fully fused Pallas call.
    output = fused_encoder_layer(params["encoder_packed"], model_input)

    return output, clsTokens, masks


# ---------------------------------- main -------------------------------------
if __name__ == "__main__":
    key = jax.random.PRNGKey(0)
    k_params, k_vid, k_aud, k_t1, k_t2, k_mask = jax.random.split(key, 6)

    args = Args()
    params = init_params(k_params, args.video_feature_size,
                         args.audio_feature_size, args.query_feature_size)

    # small, module-consistent shapes (batch must be 1 — see forward assert)
    video = jax.random.normal(k_vid, (1, 8, args.video_feature_size), jnp.float32)
    audio = jax.random.normal(k_aud, (1, 8, args.audio_feature_size), jnp.float32)
    texts = [jax.random.normal(k_t1, (1, 8, args.query_feature_size), jnp.float32),
             jax.random.normal(k_t2, (1, 8, args.query_feature_size), jnp.float32)]
    text_length = sum(t.shape[1] for t in texts)          # 16
    query_frame_numbers = jnp.array([0, 3, 5], dtype=jnp.int32)
    modalities = ["Video", "Audio", "Query"]

    output, clsTokens, masks = meme_ss_base_forward(
        params, video, texts, text_length, audio, query_frame_numbers,
        args, modalities, k_mask)

    jax.block_until_ready(output)
    for v in masks.values():
        jax.block_until_ready(v)

    assert output.shape == (1, 38, HIDDEN)
    print("KERNEL_OK")
</pallas_src>

<mosaic_0001>
module attributes {stable_mosaic.version = 11 : i64} {
  func.func @_proj_ln_kernel(%arg0: memref<3x16x24xbf16, #tpu.memory_space<vmem>>, %arg1: memref<3x24x32xbf16, #tpu.memory_space<vmem>>, %arg2: memref<3x3x32xf32, #tpu.memory_space<vmem>>, %arg3: memref<3x16x32xf32, #tpu.memory_space<vmem>>) attributes {dimension_semantics = [], scalar_prefetch = 0 : i64, scratch_operands = 0 : i64, tpu.core_type = #tpu.core_type<tc>} {
    %c0 = arith.constant 0 : index
    %c0_0 = arith.constant 0 : index
    %c0_1 = arith.constant 0 : index
    %0 = vector.load %arg0[%c0, %c0_0, %c0_1] : memref<3x16x24xbf16, #tpu.memory_space<vmem>>, vector<1x16x24xbf16>
    %1 = vector.shape_cast %0 : vector<1x16x24xbf16> to vector<16x24xbf16>
    %c0_2 = arith.constant 0 : index
    %c0_3 = arith.constant 0 : index
    %c0_4 = arith.constant 0 : index
    %2 = vector.load %arg1[%c0_2, %c0_3, %c0_4] : memref<3x24x32xbf16, #tpu.memory_space<vmem>>, vector<1x24x32xbf16>
    %3 = vector.shape_cast %2 : vector<1x24x32xbf16> to vector<24x32xbf16>
    %cst = arith.constant dense<0.000000e+00> : vector<16x32xf32>
    %4 = tpu.matmul %1, %3, %cst {dimension_numbers = #tpu.dot_dimension_numbers<[1], [0], [0], [1], [0, 0, 1, 1], [], []>} : vector<16x24xbf16>, vector<24x32xbf16>, vector<16x32xf32> -> vector<16x32xf32>
    %c0_5 = arith.constant 0 : index
    %c0_6 = arith.constant 0 : index
    %c0_7 = arith.constant 0 : index
    %5 = vector.load %arg2[%c0_5, %c0_6, %c0_7] : memref<3x3x32xf32, #tpu.memory_space<vmem>>, vector<1x1x32xf32>
    %6 = vector.shape_cast %5 : vector<1x1x32xf32> to vector<1x32xf32>
    %7 = vector.broadcast %6 : vector<1x32xf32> to vector<16x32xf32>
    %8 = arith.addf %4, %7 : vector<16x32xf32>
    %c0_8 = arith.constant 0 : index
    %c1 = arith.constant 1 : index
    %c0_9 = arith.constant 0 : index
    %9 = vector.load %arg2[%c0_8, %c1, %c0_9] : memref<3x3x32xf32, #tpu.memory_space<vmem>>, vector<1x1x32xf32>
    %10 = vector.shape_cast %9 : vector<1x1x32xf32> to vector<1x32xf32>
    %c0_10 = arith.constant 0 : index
    %c2 = arith.constant 2 : index
    %c0_11 = arith.constant 0 : index
    %11 = vector.load %arg2[%c0_10, %c2, %c0_11] : memref<3x3x32xf32, #tpu.memory_space<vmem>>, vector<1x1x32xf32>
    %12 = vector.shape_cast %11 : vector<1x1x32xf32> to vector<1x32xf32>
    %cst_12 = arith.constant dense<0.000000e+00> : vector<16xf32>
    %13 = vector.multi_reduction <add>, %8, %cst_12 [1] : vector<16x32xf32> to vector<16xf32>
    %14 = vector.shape_cast %13 : vector<16xf32> to vector<16x1xf32>
    %cst_13 = arith.constant 3.200000e+01 : f32
    %15 = vector.broadcast %cst_13 : f32 to vector<16x1xf32>
    %16 = arith.divf %14, %15 : vector<16x1xf32>
    %17 = vector.broadcast %16 : vector<16x1xf32> to vector<16x32xf32>
    %18 = arith.subf %8, %17 : vector<16x32xf32>
    %19 = arith.mulf %18, %18 : vector<16x32xf32>
    %cst_14 = arith.constant dense<0.000000e+00> : vector<16xf32>
    %20 = vector.multi_reduction <add>, %19, %cst_14 [1] : vector<16x32xf32> to vector<16xf32>
    %21 = vector.shape_cast %20 : vector<16xf32> to vector<16x1xf32>
    %cst_15 = arith.constant 3.200000e+01 : f32
    %22 = vector.broadcast %cst_15 : f32 to vector<16x1xf32>
    %23 = arith.divf %21, %22 : vector<16x1xf32>
    %24 = vector.broadcast %16 : vector<16x1xf32> to vector<16x32xf32>
    %25 = arith.subf %8, %24 : vector<16x32xf32>
    %cst_16 = arith.constant 9.99999974E-6 : f32
    %26 = vector.broadcast %cst_16 : f32 to vector<16x1xf32>
    %27 = arith.addf %23, %26 : vector<16x1xf32>
    %28 = math.rsqrt %27 : vector<16x1xf32>
    %29 = vector.broadcast %28 : vector<16x1xf32> to vector<16x32xf32>
    %30 = arith.mulf %25, %29 : vector<16x32xf32>
    %31 = vector.broadcast %10 : vector<1x32xf32> to vector<16x32xf32>
    %32 = arith.mulf %30, %31 : vector<16x32xf32>
    %33 = vector.broadcast %12 : vector<1x32xf32> to vector<16x32xf32>
    %34 = arith.addf %32, %33 : vector<16x32xf32>
    %c0_17 = arith.constant 0 : index
    %c0_18 = arith.constant 0 : index
    %c0_19 = arith.constant 0 : index
    %35 = vector.load %arg3[%c0_17, %c0_18, %c0_19] : memref<3x16x32xf32, #tpu.memory_space<vmem>>, vector<1x16x32xf32>
    %36 = vector.shape_cast %35 : vector<1x16x32xf32> to vector<16x32xf32>
    %37 = vector.shape_cast %34 : vector<16x32xf32> to vector<1x16x32xf32>
    tpu.vector_store %arg3[%c0_17, %c0_18, %c0_19], %37 {strides = array<i32>} : memref<3x16x32xf32, #tpu.memory_space<vmem>>, vector<1x16x32xf32>,
    %c1_20 = arith.constant 1 : index
    %c0_21 = arith.constant 0 : index
    %c0_22 = arith.constant 0 : index
    %38 = vector.load %arg0[%c1_20, %c0_21, %c0_22] : memref<3x16x24xbf16, #tpu.memory_space<vmem>>, vector<1x16x24xbf16>
    %39 = vector.shape_cast %38 : vector<1x16x24xbf16> to vector<16x24xbf16>
    %c1_23 = arith.constant 1 : index
    %c0_24 = arith.constant 0 : index
    %c0_25 = arith.constant 0 : index
    %40 = vector.load %arg1[%c1_23, %c0_24, %c0_25] : memref<3x24x32xbf16, #tpu.memory_space<vmem>>, vector<1x24x32xbf16>
    %41 = vector.shape_cast %40 : vector<1x24x32xbf16> to vector<24x32xbf16>
    %cst_26 = arith.constant dense<0.000000e+00> : vector<16x32xf32>
    %42 = tpu.matmul %39, %41, %cst_26 {dimension_numbers = #tpu.dot_dimension_numbers<[1], [0], [0], [1], [0, 0, 1, 1], [], []>} : vector<16x24xbf16>, vector<24x32xbf16>, vector<16x32xf32> -> vector<16x32xf32>
    %c1_27 = arith.constant 1 : index
    %c0_28 = arith.constant 0 : index
    %c0_29 = arith.constant 0 : index
    %43 = vector.load %arg2[%c1_27, %c0_28, %c0_29] : memref<3x3x32xf32, #tpu.memory_space<vmem>>, vector<1x1x32xf32>
    %44 = vector.shape_cast %43 : vector<1x1x32xf32> to vector<1x32xf32>
    %45 = vector.broadcast %44 : vector<1x32xf32> to vector<16x32xf32>
    %46 = arith.addf %42, %45 : vector<16x32xf32>
    %c1_30 = arith.constant 1 : index
    %c1_31 = arith.constant 1 : index
    %c0_32 = arith.constant 0 : index
    %47 = vector.load %arg2[%c1_30, %c1_31, %c0_32] : memref<3x3x32xf32, #tpu.memory_space<vmem>>, vector<1x1x32xf32>
    %48 = vector.shape_cast %47 : vector<1x1x32xf32> to vector<1x32xf32>
    %c1_33 = arith.constant 1 : index
    %c2_34 = arith.constant 2 : index
    %c0_35 = arith.constant 0 : index
    %49 = vector.load %arg2[%c1_33, %c2_34, %c0_35] : memref<3x3x32xf32, #tpu.memory_space<vmem>>, vector<1x1x32xf32>
    %50 = vector.shape_cast %49 : vector<1x1x32xf32> to vector<1x32xf32>
    %cst_36 = arith.constant dense<0.000000e+00> : vector<16xf32>
    %51 = vector.multi_reduction <add>, %46, %cst_36 [1] : vector<16x32xf32> to vector<16xf32>
    %52 = vector.shape_cast %51 : vector<16xf32> to vector<16x1xf32>
    %cst_37 = arith.constant 3.200000e+01 : f32
    %53 = vector.broadcast %cst_37 : f32 to vector<16x1xf32>
    %54 = arith.divf %52, %53 : vector<16x1xf32>
    %55 = vector.broadcast %54 : vector<16x1xf32> to vector<16x32xf32>
    %56 = arith.subf %46, %55 : vector<16x32xf32>
    %57 = arith.mulf %56, %56 : vector<16x32xf32>
    %cst_38 = arith.constant dense<0.000000e+00> : vector<16xf32>
    %58 = vector.multi_reduction <add>, %57, %cst_38 [1] : vector<16x32xf32> to vector<16xf32>
    %59 = vector.shape_cast %58 : vector<16xf32> to vector<16x1xf32>
    %cst_39 = arith.constant 3.200000e+01 : f32
    %60 = vector.broadcast %cst_39 : f32 to vector<16x1xf32>
    %61 = arith.divf %59, %60 : vector<16x1xf32>
    %62 = vector.broadcast %54 : vector<16x1xf32> to vector<16x32xf32>
    %63 = arith.subf %46, %62 : vector<16x32xf32>
    %cst_40 = arith.constant 9.99999974E-6 : f32
    %64 = vector.broadcast %cst_40 : f32 to vector<16x1xf32>
    %65 = arith.addf %61, %64 : vector<16x1xf32>
    %66 = math.rsqrt %65 : vector<16x1xf32>
    %67 = vector.broadcast %66 : vector<16x1xf32> to vector<16x32xf32>
    %68 = arith.mulf %63, %67 : vector<16x32xf32>
    %69 = vector.broadcast %48 : vector<1x32xf32> to vector<16x32xf32>
    %70 = arith.mulf %68, %69 : vector<16x32xf32>
    %71 = vector.broadcast %50 : vector<1x32xf32> to vector<16x32xf32>
    %72 = arith.addf %70, %71 : vector<16x32xf32>
    %c1_41 = arith.constant 1 : index
    %c0_42 = arith.constant 0 : index
    %c0_43 = arith.constant 0 : index
    %73 = vector.load %arg3[%c1_41, %c0_42, %c0_43] : memref<3x16x32xf32, #tpu.memory_space<vmem>>, vector<1x16x32xf32>
    %74 = vector.shape_cast %73 : vector<1x16x32xf32> to vector<16x32xf32>
    %75 = vector.shape_cast %72 : vector<16x32xf32> to vector<1x16x32xf32>
    tpu.vector_store %arg3[%c1_41, %c0_42, %c0_43], %75 {strides = array<i32>} : memref<3x16x32xf32, #tpu.memory_space<vmem>>, vector<1x16x32xf32>,
    %c2_44 = arith.constant 2 : index
    %c0_45 = arith.constant 0 : index
    %c0_46 = arith.constant 0 : index
    %76 = vector.load %arg0[%c2_44, %c0_45, %c0_46] : memref<3x16x24xbf16, #tpu.memory_space<vmem>>, vector<1x16x24xbf16>
    %77 = vector.shape_cast %76 : vector<1x16x24xbf16> to vector<16x24xbf16>
    %c2_47 = arith.constant 2 : index
    %c0_48 = arith.constant 0 : index
    %c0_49 = arith.constant 0 : index
    %78 = vector.load %arg1[%c2_47, %c0_48, %c0_49] : memref<3x24x32xbf16, #tpu.memory_space<vmem>>, vector<1x24x32xbf16>
    %79 = vector.shape_cast %78 : vector<1x24x32xbf16> to vector<24x32xbf16>
    %cst_50 = arith.constant dense<0.000000e+00> : vector<16x32xf32>
    %80 = tpu.matmul %77, %79, %cst_50 {dimension_numbers = #tpu.dot_dimension_numbers<[1], [0], [0], [1], [0, 0, 1, 1], [], []>} : vector<16x24xbf16>, vector<24x32xbf16>, vector<16x32xf32> -> vector<16x32xf32>
    %c2_51 = arith.constant 2 : index
    %c0_52 = arith.constant 0 : index
    %c0_53 = arith.constant 0 : index
    %81 = vector.load %arg2[%c2_51, %c0_52, %c0_53] : memref<3x3x32xf32, #tpu.memory_space<vmem>>, vector<1x1x32xf32>
    %82 = vector.shape_cast %81 : vector<1x1x32xf32> to vector<1x32xf32>
    %83 = vector.broadcast %82 : vector<1x32xf32> to vector<16x32xf32>
    %84 = arith.addf %80, %83 : vector<16x32xf32>
    %c2_54 = arith.constant 2 : index
    %c1_55 = arith.constant 1 : index
    %c0_56 = arith.constant 0 : index
    %85 = vector.load %arg2[%c2_54, %c1_55, %c0_56] : memref<3x3x32xf32, #tpu.memory_space<vmem>>, vector<1x1x32xf32>
    %86 = vector.shape_cast %85 : vector<1x1x32xf32> to vector<1x32xf32>
    %c2_57 = arith.constant 2 : index
    %c2_58 = arith.constant 2 : index
    %c0_59 = arith.constant 0 : index
    %87 = vector.load %arg2[%c2_57, %c2_58, %c0_59] : memref<3x3x32xf32, #tpu.memory_space<vmem>>, vector<1x1x32xf32>
    %88 = vector.shape_cast %87 : vector<1x1x32xf32> to vector<1x32xf32>
    %cst_60 = arith.constant dense<0.000000e+00> : vector<16xf32>
    %89 = vector.multi_reduction <add>, %84, %cst_60 [1] : vector<16x32xf32> to vector<16xf32>
    %90 = vector.shape_cast %89 : vector<16xf32> to vector<16x1xf32>
    %cst_61 = arith.constant 3.200000e+01 : f32
    %91 = vector.broadcast %cst_61 : f32 to vector<16x1xf32>
    %92 = arith.divf %90, %91 : vector<16x1xf32>
    %93 = vector.broadcast %92 : vector<16x1xf32> to vector<16x32xf32>
    %94 = arith.subf %84, %93 : vector<16x32xf32>
    %95 = arith.mulf %94, %94 : vector<16x32xf32>
    %cst_62 = arith.constant dense<0.000000e+00> : vector<16xf32>
    %96 = vector.multi_reduction <add>, %95, %cst_62 [1] : vector<16x32xf32> to vector<16xf32>
    %97 = vector.shape_cast %96 : vector<16xf32> to vector<16x1xf32>
    %cst_63 = arith.constant 3.200000e+01 : f32
    %98 = vector.broadcast %cst_63 : f32 to vector<16x1xf32>
    %99 = arith.divf %97, %98 : vector<16x1xf32>
    %100 = vector.broadcast %92 : vector<16x1xf32> to vector<16x32xf32>
    %101 = arith.subf %84, %100 : vector<16x32xf32>
    %cst_64 = arith.constant 9.99999974E-6 : f32
    %102 = vector.broadcast %cst_64 : f32 to vector<16x1xf32>
    %103 = arith.addf %99, %102 : vector<16x1xf32>
    %104 = math.rsqrt %103 : vector<16x1xf32>
    %105 = vector.broadcast %104 : vector<16x1xf32> to vector<16x32xf32>
    %106 = arith.mulf %101, %105 : vector<16x32xf32>
    %107 = vector.broadcast %86 : vector<1x32xf32> to vector<16x32xf32>
    %108 = arith.mulf %106, %107 : vector<16x32xf32>
    %109 = vector.broadcast %88 : vector<1x32xf32> to vector<16x32xf32>
    %110 = arith.addf %108, %109 : vector<16x32xf32>
    %c2_65 = arith.constant 2 : index
    %c0_66 = arith.constant 0 : index
    %c0_67 = arith.constant 0 : index
    %111 = vector.load %arg3[%c2_65, %c0_66, %c0_67] : memref<3x16x32xf32, #tpu.memory_space<vmem>>, vector<1x16x32xf32>
    %112 = vector.shape_cast %111 : vector<1x16x32xf32> to vector<16x32xf32>
    %113 = vector.shape_cast %110 : vector<16x32xf32> to vector<1x16x32xf32>
    tpu.vector_store %arg3[%c2_65, %c0_66, %c0_67], %113 {strides = array<i32>} : memref<3x16x32xf32, #tpu.memory_space<vmem>>, vector<1x16x32xf32>,
    return
  }
}

</mosaic_0001>

<llo_original>
// kernel: tpu_custom_call.1
$region0: #{tpu_custom_call.1}
  #allocation0 [shape = 'u32[]', space=smem, size = 0x4, offset = 0x4, fixed_abs, tag = 'smem constant byte address 0x4 - core index']
  #allocation1 [shape = 'u32[144,128]{1,0:T(1,128)}', space=vmem, size = 0x12000, scoped, tag = 'internal scratch']
  %s0 = inlined_call_operand.hbm [shape: bf16[3,16,24], index: 0, kind: input, shape index: {}]
  %s1 = inlined_call_operand.hbm [shape: bf16[3,24,32], index: 1, kind: input, shape index: {}]
  %s2 = inlined_call_operand.hbm [shape: f32[3,3,32], index: 2, kind: input, shape index: {}]
  %s3 = inlined_call_operand.hbm [shape: f32[3,16,32], index: 3, kind: output, shape index: {}]
  %s4 = sld [smem:[#allocation0]]
  $region34: #{tpu_custom_call.1} parent=0
    _
  %s6 = ssub.s32 1, %s4
  %s7 = scalar_select 0, %s6, %s4
  $region1: #{tpu_custom_call.1} parent=0
    #allocation2 [shape = 'u8[12288]{0}', space=vmem, size = 0x3000, scoped, tag = 'input window, operand 0, single buffered']
    #allocation3 [shape = 's32[1]{0}', space=sflag, size = 0x4, scoped, tag = 'scoped memory for tpu_custom_call.1']
    #allocation4 [shape = 's32[1]{0}', space=sflag, size = 0x4, scoped, tag = 'scoped memory for tpu_custom_call.1']
    #allocation5 [shape = 'u8[18432]{0}', space=vmem, size = 0x4800, scoped, tag = 'input window, operand 1, single buffered']
    #allocation6 [shape = 's32[1]{0}', space=sflag, size = 0x4, scoped, tag = 'scoped memory for tpu_custom_call.1']
    #allocation7 [shape = 'u8[6144]{0}', space=vmem, size = 0x1800, scoped, tag = 'input window, operand 2, single buffered']
    #allocation8 [shape = 'u8[24576]{0}', space=vmem, size = 0x6000, scoped, tag = 'output window, operand 0, single buffered']
    %8 = vsyncpa [#allocation3], 0
    %9 = vsyncpa [#allocation6], 0
    %10 = vsyncpa [#allocation4], 0
    // Predicated region
    $region2: #{tpu_custom_call.1} parent=1 // pred_check
      _
    $region3: #{tpu_custom_call.1} parent=1 // pred_check_branch
      %12 = sbr.rel (0) target = $region5
    $region4: #{tpu_custom_call.1} parent=1 // pred_region
      %s14 = ssub.s32 384, 384
      %15 = vsyncadd [#allocation3], %s14
      %s16 = sshll.u32 [#allocation2], 4
      %s17 = int_to_ptr.vmem [resolvable:$true] %s16
      %22 = dma.hbm_to_vmem [thread:$0]  %s0, 384, %s17, [#allocation3], 64, 64, 4
    $region5: #{tpu_custom_call.1} parent=1 // pred_fallthru
      _
    // Predicated region
    $region6: #{tpu_custom_call.1} parent=1 // pred_check
      _
    $region7: #{tpu_custom_call.1} parent=1 // pred_check_branch
      %24 = sbr.rel (0) target = $region9
    $region8: #{tpu_custom_call.1} parent=1 // pred_region
      %s26 = ssub.s32 576, 576
      %27 = vsyncadd [#allocation6], %s26
      %s28 = sshll.u32 [#allocation5], 4
      %s29 = int_to_ptr.vmem [resolvable:$true] %s28
      %34 = dma.hbm_to_vmem [thread:$0]  %s1, 576, %s29, [#allocation6], 64, 64, 4
    $region9: #{tpu_custom_call.1} parent=1 // pred_fallthru
      _
    // Predicated region
    $region10: #{tpu_custom_call.1} parent=1 // pred_check
      _
    $region11: #{tpu_custom_call.1} parent=1 // pred_check_branch
      %36 = sbr.rel (0) target = $region13
    $region12: #{tpu_custom_call.1} parent=1 // pred_region
      %s38 = ssub.s32 192, 192
      %39 = vsyncadd [#allocation6], %s38
      %s40 = sshll.u32 [#allocation7], 4
      %s41 = int_to_ptr.vmem [resolvable:$true] %s40
      %46 = dma.hbm_to_vmem [thread:$0]  %s2, 192, %s41, [#allocation6], 64, 64, 4
    $region13: #{tpu_custom_call.1} parent=1 // pred_fallthru
      _
    // Predicated region
    $region14: #{tpu_custom_call.1} parent=1 // pred_check
      _
    $region15: #{tpu_custom_call.1} parent=1 // pred_check_branch
      %48 = sbr.rel (0) target = $region17
    $region16: #{tpu_custom_call.1} parent=1 // pred_region
      %49 = dma.done [#allocation3], 384
    $region17: #{tpu_custom_call.1} parent=1 // pred_fallthru
      _
    // Predicated region
    $region18: #{tpu_custom_call.1} parent=1 // pred_check
      _
    $region19: #{tpu_custom_call.1} parent=1 // pred_check_branch
      %51 = sbr.rel (0) target = $region21
    $region20: #{tpu_custom_call.1} parent=1 // pred_region
      %52 = dma.done [#allocation6], 576
    $region21: #{tpu_custom_call.1} parent=1 // pred_fallthru
      _
    // Predicated region
    $region22: #{tpu_custom_call.1} parent=1 // pred_check
      _
    $region23: #{tpu_custom_call.1} parent=1 // pred_check_branch
      %54 = sbr.rel (0) target = $region25
    $region24: #{tpu_custom_call.1} parent=1 // pred_region
      %55 = dma.done [#allocation6], 192
    $region25: #{tpu_custom_call.1} parent=1 // pred_fallthru
      _
    %v57 = vld [vmem:[#allocation2] sm:$0xf]
    %v58 = vld [vmem:[#allocation2 + $0x4] sm:$0xf]
    %v59 = vld [vmem:[#allocation5] sm:$0xf]
    %v60 = vld [vmem:[#allocation5 + $0x4] sm:$0xf]
    %v61 = vld [vmem:[#allocation5 + $0x8] sm:$0xf]
    %v62 = vld [vmem:[#allocation7] sm:$0x1]
    %v63 = vlaneseq
    %v64 = vshrl.u32 %v63, 7
    %v65 = vsub.s32 0, %v64
    %v66 = vrot.slane %v62, %v65
    %v69 = vunpack.c.l.b16 %v57
    %v70 = vunpack.c.l.b16 %v58
    %v71 = vpack.c.b16 %v70, %v69
    %v75 = vunpack.c.l.b16 %v59
    %v76 = vunpack.c.l.b16 %v60
    %v77 = vunpack.c.l.b16 %v61
    %v78 = vpack.c.b16 %v76, %v75
    %v79 = vpack.c.b16 %v77, %v77
    %vm81 = vcmask 195584
    %v83 = vsel %vm81, %v71, 0
    %vm85 = vcmask 1043456
    %v87 = vsel %vm85, %v79, 0
    %89 = vmatprep.subr.bf16.mxu0 0
    %90 = vmatpush1.bf16.msra.mxu0 %v78
    %91 = vmatprep.subr.bf16.mxu0 0
    %92 = vmatpush1.bf16.msra.mxu0 %v87
    %93 = vmatprep.subr.bf16.mxu0 0
    %94 = vmatpush1.bf16.msra.mxu0 0
    %95 = vmatprep.subr.bf16.mxu0 0
    %96 = vmatpush1.bf16.msra.mxu0 0
    %97 = vmatprep.subr.bf16.mxu0 0
    %98 = vmatpush1.bf16.msra.mxu0 0
    %99 = vmatprep.subr.bf16.mxu0 0
    %100 = vmatpush1.bf16.msra.mxu0 0
    %101 = vmatprep.subr.bf16.mxu0 0
    %102 = vmatpush1.bf16.msra.mxu0 0
    %103 = vmatprep.subr.bf16.mxu0 0
    %104 = vmatpush1.bf16.msra.mxu0 0
    %105 = vmatprep.subr.bf16.mxu0 0
    %106 = vmatpush1.bf16.msra.mxu0 0
    %107 = vmatprep.subr.bf16.mxu0 0
    %108 = vmatpush1.bf16.msra.mxu0 0
    %109 = vmatprep.subr.bf16.mxu0 0
    %110 = vmatpush1.bf16.msra.mxu0 0
    %111 = vmatprep.subr.bf16.mxu0 0
    %112 = vmatpush1.bf16.msra.mxu0 0
    %113 = vmatprep.subr.bf16.mxu0 0
    %114 = vmatpush1.bf16.msra.mxu0 0
    %115 = vmatprep.subr.bf16.mxu0 0
    %116 = vmatpush1.bf16.msra.mxu0 0
    %117 = vmatprep.subr.bf16.mxu0 0
    %118 = vmatpush1.bf16.msra.mxu0 0
    %119 = vmatprep.subr.bf16.mxu0 0
    %120 = vmatpush1.bf16.msra.mxu0 0
    %121 = vmatprep.mubr.bf16.mxu0 0
    %122 = vmatmul.mubr.bf16.gmra.mrb[0].mxu0 %v83
    %v123 = vpop.f32.mrb[0].mxu0
    %v124 = vadd.f32 %v66, %v123
    %v125 = vpop.f32.mrb[0].mxu0
    %v126 = vpop.f32.mrb[0].mxu0
    %v127 = vadd.f32 %v66, %v126
    %v128 = vpop.f32.mrb[0].mxu0
    %129 = vdwg.mxu0
    %v130 = vld [vmem:[#allocation7 + $0x1] sm:$0x1]
    %v131 = vld [vmem:[#allocation7 + $0x2] sm:$0x1]
    %vm132 = vcmask 261120
    %v133 = vsel %vm132, %v124, 0.0
    %134 = vadd.xlane.f32.xlu0 %v133
    %v135 = vpop.xlane.xlu0 %134
    %v136 = vsel %vm132, %v127, 0.0
    %137 = vadd.xlane.f32.xlu0 %v136
    %v138 = vpop.xlane.xlu0 %137
    %v139 = vrcp.pop 32.0
    %v140 = vmul.f32 %v135, %v139
    %v141 = vmul.f32 %v138, %v139
    %v142 = vsub.f32 %v124, %v140
    %v143 = vsub.f32 %v127, %v141
    %v144 = vmul.f32 %v142, %v142
    %v145 = vmul.f32 %v143, %v143
    %v146 = vsel %vm132, %v144, 0.0
    %147 = vadd.xlane.f32.xlu0 %v146
    %v148 = vpop.xlane.xlu0 %147
    %v149 = vsel %vm132, %v145, 0.0
    %150 = vadd.xlane.f32.xlu0 %v149
    %v151 = vpop.xlane.xlu0 %150
    %v152 = vmul.f32 %v148, %v139
    %v153 = vmul.f32 %v151, %v139
    %v154 = vadd.f32 %v152, 1e-05
    %v155 = vadd.f32 %v153, 1e-05
    %v156 = vrsqrt.pop %v154
    %v157 = vrsqrt.pop %v155
    %v158 = vmul.f32 %v142, %v156
    %v159 = vmul.f32 %v143, %v157
    %v160 = vlaneseq
    %v161 = vshrl.u32 %v160, 7
    %v162 = vsub.s32 0, %v161
    %v163 = vrot.slane %v130, %v162
    %v164 = vmul.f32 %v158, %v163
    %v165 = vmul.f32 %v159, %v163
    %v166 = vlaneseq
    %v167 = vshrl.u32 %v166, 7
    %v168 = vsub.s32 0, %v167
    %v169 = vrot.slane %v131, %v168
    %v170 = vadd.f32 %v164, %v169
    %v171 = vadd.f32 %v165, %v169
    %172 = vst.msk [vmem:[#allocation8] sm:$0xff] %vm132, %v170
    %173 = vst.msk [vmem:[#allocation8 + $0x8] sm:$0xff] %vm132, %v171
    %s174 = scalar_lea.vmem [#allocation2], 8
    %v175 = vld [vmem:[%s174] sm:$0xf]
    %v176 = vld [vmem:[%s174 + $0x4] sm:$0xf]
    %s177 = scalar_lea.vmem [#allocation5], 12
    %v178 = vld [vmem:[%s177] sm:$0xf]
    %v179 = vld [vmem:[%s177 + $0x4] sm:$0xf]
    %v180 = vld [vmem:[%s177 + $0x8] sm:$0xf]
    %s181 = scalar_lea.vmem [#allocation7], 4
    %v182 = vld [vmem:[%s181] sm:$0x1]
    %v183 = vlaneseq
    %v184 = vshrl.u32 %v183, 7
    %v185 = vsub.s32 0, %v184
    %v186 = vrot.slane %v182, %v185
    %v189 = vunpack.c.l.b16 %v175
    %v190 = vunpack.c.l.b16 %v176
    %v191 = vpack.c.b16 %v190, %v189
    %v195 = vunpack.c.l.b16 %v178
    %v196 = vunpack.c.l.b16 %v179
    %v197 = vunpack.c.l.b16 %v180
    %v198 = vpack.c.b16 %v196, %v195
    %v199 = vpack.c.b16 %v197, %v197
    %v202 = vsel %vm81, %v191, 0
    %v205 = vsel %vm85, %v199, 0
    %207 = vmatprep.subr.bf16.mxu0 0
    %208 = vmatpush1.bf16.msra.mxu0 %v198
    %209 = vmatprep.subr.bf16.mxu0 0
    %210 = vmatpush1.bf16.msra.mxu0 %v205
    %211 = vmatprep.subr.bf16.mxu0 0
    %212 = vmatpush1.bf16.msra.mxu0 0
    %213 = vmatprep.subr.bf16.mxu0 0
    %214 = vmatpush1.bf16.msra.mxu0 0
    %215 = vmatprep.subr.bf16.mxu0 0
    %216 = vmatpush1.bf16.msra.mxu0 0
    %217 = vmatprep.subr.bf16.mxu0 0
    %218 = vmatpush1.bf16.msra.mxu0 0
    %219 = vmatprep.subr.bf16.mxu0 0
    %220 = vmatpush1.bf16.msra.mxu0 0
    %221 = vmatprep.subr.bf16.mxu0 0
    %222 = vmatpush1.bf16.msra.mxu0 0
    %223 = vmatprep.subr.bf16.mxu0 0
    %224 = vmatpush1.bf16.msra.mxu0 0
    %225 = vmatprep.subr.bf16.mxu0 0
    %226 = vmatpush1.bf16.msra.mxu0 0
    %227 = vmatprep.subr.bf16.mxu0 0
    %228 = vmatpush1.bf16.msra.mxu0 0
    %229 = vmatprep.subr.bf16.mxu0 0
    %230 = vmatpush1.bf16.msra.mxu0 0
    %231 = vmatprep.subr.bf16.mxu0 0
    %232 = vmatpush1.bf16.msra.mxu0 0
    %233 = vmatprep.subr.bf16.mxu0 0
    %234 = vmatpush1.bf16.msra.mxu0 0
    %235 = vmatprep.subr.bf16.mxu0 0
    %236 = vmatpush1.bf16.msra.mxu0 0
    %237 = vmatprep.subr.bf16.mxu0 0
    %238 = vmatpush1.bf16.msra.mxu0 0
    %239 = vmatprep.mubr.bf16.mxu0 0
    %240 = vmatmul.mubr.bf16.gmra.mrb[0].mxu0 %v202
    %v241 = vpop.f32.mrb[0].mxu0
    %v242 = vadd.f32 %v186, %v241
    %v243 = vpop.f32.mrb[0].mxu0
    %v244 = vpop.f32.mrb[0].mxu0
    %v245 = vadd.f32 %v186, %v244
    %v246 = vpop.f32.mrb[0].mxu0
    %247 = vdwg.mxu0
    %v248 = vld [vmem:[%s181 + $0x1] sm:$0x1]
    %v249 = vld [vmem:[%s181 + $0x2] sm:$0x1]
    %v250 = vsel %vm132, %v242, 0.0
    %251 = vadd.xlane.f32.xlu0 %v250
    %v252 = vpop.xlane.xlu0 %251
    %v253 = vsel %vm132, %v245, 0.0
    %254 = vadd.xlane.f32.xlu0 %v253
    %v255 = vpop.xlane.xlu0 %254
    %v256 = vmul.f32 %v252, %v139
    %v257 = vmul.f32 %v255, %v139
    %v258 = vsub.f32 %v242, %v256
    %v259 = vsub.f32 %v245, %v257
    %v260 = vmul.f32 %v258, %v258
    %v261 = vmul.f32 %v259, %v259
    %v262 = vsel %vm132, %v260, 0.0
    %263 = vadd.xlane.f32.xlu0 %v262
    %v264 = vpop.xlane.xlu0 %263
    %v265 = vsel %vm132, %v261, 0.0
    %266 = vadd.xlane.f32.xlu0 %v265
    %v267 = vpop.xlane.xlu0 %266
    %v268 = vmul.f32 %v264, %v139
    %v269 = vmul.f32 %v267, %v139
    %v270 = vadd.f32 %v268, 1e-05
    %v271 = vadd.f32 %v269, 1e-05
    %v272 = vrsqrt.pop %v270
    %v273 = vrsqrt.pop %v271
    %v274 = vmul.f32 %v258, %v272
    %v275 = vmul.f32 %v259, %v273
    %v276 = vlaneseq
    %v277 = vshrl.u32 %v276, 7
    %v278 = vsub.s32 0, %v277
    %v279 = vrot.slane %v248, %v278
    %v280 = vmul.f32 %v274, %v279
    %v281 = vmul.f32 %v275, %v279
    %v282 = vlaneseq
    %v283 = vshrl.u32 %v282, 7
    %v284 = vsub.s32 0, %v283
    %v285 = vrot.slane %v249, %v284
    %v286 = vadd.f32 %v280, %v285
    %v287 = vadd.f32 %v281, %v285
    %s288 = scalar_lea.vmem [#allocation8], 16
    %289 = vst.msk [vmem:[%s288] sm:$0xff] %vm132, %v286
    %290 = vst.msk [vmem:[%s288 + $0x8] sm:$0xff] %vm132, %v287
    %s291 = scalar_lea.vmem [#allocation2], 16
    %v292 = vld [vmem:[%s291] sm:$0xf]
    %v293 = vld [vmem:[%s291 + $0x4] sm:$0xf]
    %s294 = scalar_lea.vmem [#allocation5], 24
    %v295 = vld [vmem:[%s294] sm:$0xf]
    %v296 = vld [vmem:[%s294 + $0x4] sm:$0xf]
    %v297 = vld [vmem:[%s294 + $0x8] sm:$0xf]
    %s298 = scalar_lea.vmem [#allocation7], 8
    %v299 = vld [vmem:[%s298] sm:$0x1]
    %v300 = vlaneseq
    %v301 = vshrl.u32 %v300, 7
    %v302 = vsub.s32 0, %v301
    %v303 = vrot.slane %v299, %v302
    %v306 = vunpack.c.l.b16 %v292
    %v307 = vunpack.c.l.b16 %v293
    %v308 = vpack.c.b16 %v307, %v306
    %v312 = vunpack.c.l.b16 %v295
    %v313 = vunpack.c.l.b16 %v296
    %v314 = vunpack.c.l.b16 %v297
    %v315 = vpack.c.b16 %v313, %v312
    %v316 = vpack.c.b16 %v314, %v314
    %v319 = vsel %vm81, %v308, 0
    %v322 = vsel %vm85, %v316, 0
    %324 = vmatprep.subr.bf16.mxu0 0
    %325 = vmatpush1.bf16.msra.mxu0 %v315
    %326 = vmatprep.subr.bf16.mxu0 0
    %327 = vmatpush1.bf16.msra.mxu0 %v322
    %328 = vmatprep.subr.bf16.mxu0 0
    %329 = vmatpush1.bf16.msra.mxu0 0
    %330 = vmatprep.subr.bf16.mxu0 0
    %331 = vmatpush1.bf16.msra.mxu0 0
    %332 = vmatprep.subr.bf16.mxu0 0
    %333 = vmatpush1.bf16.msra.mxu0 0
    %334 = vmatprep.subr.bf16.mxu0 0
    %335 = vmatpush1.bf16.msra.mxu0 0
    %336 = vmatprep.subr.bf16.mxu0 0
    %337 = vmatpush1.bf16.msra.mxu0 0
    %338 = vmatprep.subr.bf16.mxu0 0
    %339 = vmatpush1.bf16.msra.mxu0 0
    %340 = vmatprep.subr.bf16.mxu0 0
    %341 = vmatpush1.bf16.msra.mxu0 0
    %342 = vmatprep.subr.bf16.mxu0 0
    %343 = vmatpush1.bf16.msra.mxu0 0
    %344 = vmatprep.subr.bf16.mxu0 0
    %345 = vmatpush1.bf16.msra.mxu0 0
    %346 = vmatprep.subr.bf16.mxu0 0
    %347 = vmatpush1.bf16.msra.mxu0 0
    %348 = vmatprep.subr.bf16.mxu0 0
    %349 = vmatpush1.bf16.msra.mxu0 0
    %350 = vmatprep.subr.bf16.mxu0 0
    %351 = vmatpush1.bf16.msra.mxu0 0
    %352 = vmatprep.subr.bf16.mxu0 0
    %353 = vmatpush1.bf16.msra.mxu0 0
    %354 = vmatprep.subr.bf16.mxu0 0
    %355 = vmatpush1.bf16.msra.mxu0 0
    %356 = vmatprep.mubr.bf16.mxu0 0
    %357 = vmatmul.mubr.bf16.gmra.mrb[0].mxu0 %v319
    %v358 = vpop.f32.mrb[0].mxu0
    %v359 = vadd.f32 %v303, %v358
    %v360 = vpop.f32.mrb[0].mxu0
    %v361 = vpop.f32.mrb[0].mxu0
    %v362 = vadd.f32 %v303, %v361
    %v363 = vpop.f32.mrb[0].mxu0
    %364 = vdwg.mxu0
    %v365 = vld [vmem:[%s298 + $0x1] sm:$0x1]
    %v366 = vld [vmem:[%s298 + $0x2] sm:$0x1]
    %v367 = vsel %vm132, %v359, 0.0
    %368 = vadd.xlane.f32.xlu0 %v367
    %v369 = vpop.xlane.xlu0 %368
    %v370 = vsel %vm132, %v362, 0.0
    %371 = vadd.xlane.f32.xlu0 %v370
    %v372 = vpop.xlane.xlu0 %371
    %v373 = vmul.f32 %v369, %v139
    %v374 = vmul.f32 %v372, %v139
    %v375 = vsub.f32 %v359, %v373
    %v376 = vsub.f32 %v362, %v374
    %v377 = vmul.f32 %v375, %v375
    %v378 = vmul.f32 %v376, %v376
    %v379 = vsel %vm132, %v377, 0.0
    %380 = vadd.xlane.f32.xlu0 %v379
    %v381 = vpop.xlane.xlu0 %380
    %v382 = vsel %vm132, %v378, 0.0
    %383 = vadd.xlane.f32.xlu0 %v382
    %v384 = vpop.xlane.xlu0 %383
    %v385 = vmul.f32 %v381, %v139
    %v386 = vmul.f32 %v384, %v139
    %v387 = vadd.f32 %v385, 1e-05
    %v388 = vadd.f32 %v386, 1e-05
    %v389 = vrsqrt.pop %v387
    %v390 = vrsqrt.pop %v388
    %v391 = vmul.f32 %v375, %v389
    %v392 = vmul.f32 %v376, %v390
    %v393 = vlaneseq
    %v394 = vshrl.u32 %v393, 7
    %v395 = vsub.s32 0, %v394
    %v396 = vrot.slane %v365, %v395
    %v397 = vmul.f32 %v391, %v396
    %v398 = vmul.f32 %v392, %v396
    %v399 = vlaneseq
    %v400 = vshrl.u32 %v399, 7
    %v401 = vsub.s32 0, %v400
    %v402 = vrot.slane %v366, %v401
    %v403 = vadd.f32 %v397, %v402
    %v404 = vadd.f32 %v398, %v402
    %s405 = scalar_lea.vmem [#allocation8], 32
    %406 = vst.msk [vmem:[%s405] sm:$0xff] %vm132, %v403
    %407 = vst.msk [vmem:[%s405 + $0x8] sm:$0xff] %vm132, %v404
    // Predicated region
    $region26: #{tpu_custom_call.1} parent=1 // pred_check
      _
    $region27: #{tpu_custom_call.1} parent=1 // pred_check_branch
      %409 = sbr.rel (0) target = $region29
    $region28: #{tpu_custom_call.1} parent=1 // pred_region
      %s411 = ssub.s32 768, 768
      %412 = vsyncadd [#allocation4], %s411
      %s413 = sshll.u32 [#allocation8], 4
      %s414 = int_to_ptr.vmem [resolvable:$true] %s413
      %419 = dma.vmem_to_hbm [thread:$0]  %s414, 768, %s3, [#allocation4], 128, 128, 8
    $region29: #{tpu_custom_call.1} parent=1 // pred_fallthru
      _
    // Predicated region
    $region30: #{tpu_custom_call.1} parent=1 // pred_check
      _
    $region31: #{tpu_custom_call.1} parent=1 // pred_check_branch
      %421 = sbr.rel (0) target = $region33
    $region32: #{tpu_custom_call.1} parent=1 // pred_region
      %422 = dma.done [#allocation4], 768
    $region33: #{tpu_custom_call.1} parent=1 // pred_fallthru
      _
    %423 = vsyncpa [#allocation3], 1
    %424 = vsyncpa [#allocation6], 1
    %425 = vsyncpa [#allocation4], 1

</llo_original>
